<compile_context>
chip_gen: v7x
topology: tpu7x:2x2x1
jax: 0.10.0
libtpu: 0.0.40
codegen_flags: <defaults>
</compile_context>

<pallas_src>
import functools

import jax
import jax.numpy as jnp
from jax import lax
from jax.experimental import pallas as pl
from jax.experimental.pallas import tpu as pltpu


def _dw_conv_kernel(x_ref, w_ref, b_ref, o_ref, *, H_out, Wlane, kh, kw, CK):
    """Depthwise conv for one batch image, all output channels at once.

    x_ref: (1, Hp, Wp*CK)    padded, channels-last-flattened input
                             x_ref[0, y, x*CK + co] = x_pad[n, co//K, y, x]
    w_ref: (kh*kw, Wlane)    packed weights, w_ref[i*kw+j, x*CK+co] = w[co,0,i,j]
    b_ref: (1, Wlane)        packed bias,    b_ref[0, x*CK+co]      = bias[co]
    o_ref: (1, H_out, Wlane) output slab,  o_ref[0, y, x*CK+co] = out[n, co, y, x]
    """
    acc = jnp.zeros((H_out, Wlane), jnp.float32)
    # Shift-and-accumulate over the kh*kw taps (static, fully unrolled).
    # Each tap is one full-lane (H_out, Wlane) slice: the column shift j moves
    # by j*CK lanes in the flattened (x, channel) axis, the row shift by i
    # sublane-rows; one FMA per tap covers every output channel & column.
    for i in range(kh):
        for j in range(kw):
            t = i * kw + j
            tap = x_ref[0, i:i + H_out, j * CK:j * CK + Wlane].astype(jnp.float32)
            wrow = w_ref[t:t + 1, :].astype(jnp.float32)       # (1, Wlane)
            acc = acc + wrow * tap
    o_ref[0] = (acc + b_ref[...].astype(jnp.float32)).astype(o_ref.dtype)


def deepthwise_forward(x, weight, bias, *, kernel_per_layer, padding):
    """x: (N, C, H, W); weight: (C*K, 1, kh, kw); bias: (C*K,)."""
    N, C, H, W = x.shape
    CK, _, kh, kw = weight.shape
    K = kernel_per_layer
    assert CK == C * K
    H_out = H + 2 * padding - kh + 1
    W_out = W + 2 * padding - kw + 1
    Hp = H + 2 * padding
    Wp = W + 2 * padding
    Wlane = W_out * CK          # lane width of the compute/output slabs

    # ---- wrapper-side layout plumbing (no arithmetic) ----------------------
    # zero-pad spatial dims, go channels-last, expand groups (co -> co // K),
    # flatten (x, channel) into one lane-dense axis.
    x_pad = jnp.pad(x, ((0, 0), (0, 0), (padding, padding), (padding, padding)))
    x_cl = jnp.transpose(x_pad, (0, 2, 3, 1))            # (N, Hp, Wp, C)
    x_rep = jnp.repeat(x_cl, K, axis=-1)                 # (N, Hp, Wp, CK)
    x_flat = x_rep.reshape(N, Hp, Wp * CK)               # (N, Hp, Wp*CK)

    # pack weights: w_packed[i*kw + j, x*CK + co] = weight[co, 0, i, j]
    w_taps = jnp.transpose(weight[:, 0, :, :], (1, 2, 0)).reshape(kh * kw, CK)
    w_packed = jnp.tile(w_taps, (1, W_out))              # (kh*kw, Wlane)
    b_packed = jnp.tile(bias, (W_out,)).reshape(1, Wlane)

    kernel = functools.partial(_dw_conv_kernel, H_out=H_out, Wlane=Wlane,
                               kh=kh, kw=kw, CK=CK)

    out_flat = pl.pallas_call(
        kernel,
        out_shape=jax.ShapeDtypeStruct((N, H_out, Wlane), x.dtype),
        grid_spec=pltpu.PrefetchScalarGridSpec(
            num_scalar_prefetch=0,
            grid=(N,),
            in_specs=[
                # one padded image per step (all channels, already expanded)
                pl.BlockSpec((1, Hp, Wp * CK), lambda n: (n, 0, 0)),
                # full packed weights / bias, constant index -> fetched once
                pl.BlockSpec((kh * kw, Wlane), lambda n: (0, 0)),
                pl.BlockSpec((1, Wlane), lambda n: (0, 0)),
            ],
            out_specs=pl.BlockSpec((1, H_out, Wlane), lambda n: (n, 0, 0)),
        ),
        compiler_params=pltpu.CompilerParams(
            dimension_semantics=("parallel",)),
    )(x_flat, w_packed, b_packed)

    # back to PyTorch's NCHW
    out = out_flat.reshape(N, H_out, W_out, CK)
    return jnp.transpose(out, (0, 3, 1, 2))


def _reference(x, weight, bias, padding, groups):
    # lax depthwise conv reference (NCHW, OIHW).
    out = lax.conv_general_dilated(
        x, weight,
        window_strides=(1, 1),
        padding=[(padding, padding), (padding, padding)],
        dimension_numbers=("NCHW", "OIHW", "NCHW"),
        feature_group_count=groups,
    )
    return out + bias[None, :, None, None]


if __name__ == "__main__":
    # Module config: Deepthwise(in_channels=4, kernel_per_layer=2,
    #                           kernel_size=3, padding=1)
    N, C, H, W = 2, 4, 16, 16
    K = 2           # kernel_per_layer
    ks = 3          # kernel_size
    pad = 1

    key = jax.random.PRNGKey(0)
    kx, kw_, kb = jax.random.split(key, 3)

    x = jax.random.normal(kx, (N, C, H, W), dtype=jnp.float32)
    fan_in = 1 * ks * ks
    bound = 1.0 / (fan_in ** 0.5)
    weight = jax.random.uniform(kw_, (C * K, 1, ks, ks),
                                minval=-bound, maxval=bound,
                                dtype=jnp.float32)
    bias = jax.random.uniform(kb, (C * K,), minval=-bound, maxval=bound,
                              dtype=jnp.float32)

    out = deepthwise_forward(x, weight, bias, kernel_per_layer=K, padding=pad)
    out = jax.block_until_ready(out)

    ref = _reference(x, weight, bias, pad, groups=C)
    assert out.shape == ref.shape == (N, C * K, H, W)
    assert jnp.allclose(out, ref, atol=1e-5, rtol=1e-5), (
        f"max err {jnp.max(jnp.abs(out - ref))}")

    print("KERNEL_OK")
</pallas_src>

<mosaic_0001>
module attributes {stable_mosaic.version = 11 : i64} {
  func.func @_dw_conv_kernel(%arg0: i32, %arg1: memref<1x18x144xf32, #tpu.memory_space<vmem>>, %arg2: memref<9x128xf32, #tpu.memory_space<vmem>>, %arg3: memref<1x128xf32, #tpu.memory_space<vmem>>, %arg4: memref<1x16x128xf32, #tpu.memory_space<vmem>>) attributes {dimension_semantics = [#tpu.dimension_semantics<parallel>], iteration_bounds = array<i64: 2>, scalar_prefetch = 0 : i64, scratch_operands = 0 : i64, tpu.core_type = #tpu.core_type<tc>, window_params = [{transform_indices = @transform_0, window_bounds = array<i64: 1, 18, 144>}, {pipeline_mode = #tpu.pipeline_mode<synchronous>, transform_indices = @transform_1, window_bounds = array<i64: 9, 128>}, {pipeline_mode = #tpu.pipeline_mode<synchronous>, transform_indices = @transform_2, window_bounds = array<i64: 1, 128>}, {transform_indices = @transform_3, window_bounds = array<i64: 1, 16, 128>}]} {
    %cst = arith.constant 0.000000e+00 : f32
    %0 = vector.broadcast %cst : f32 to vector<16x128xf32>
    %c0 = arith.constant 0 : index
    %c0_0 = arith.constant 0 : index
    %c0_1 = arith.constant 0 : index
    %1 = vector.load %arg1[%c0, %c0_0, %c0_1] : memref<1x18x144xf32, #tpu.memory_space<vmem>>, vector<1x16x128xf32>
    %2 = vector.shape_cast %1 : vector<1x16x128xf32> to vector<16x128xf32>
    %c0_2 = arith.constant 0 : index
    %c0_3 = arith.constant 0 : index
    %3 = vector.load %arg2[%c0_2, %c0_3] : memref<9x128xf32, #tpu.memory_space<vmem>>, vector<1x128xf32>
    %4 = vector.broadcast %3 : vector<1x128xf32> to vector<16x128xf32>
    %5 = arith.mulf %4, %2 : vector<16x128xf32>
    %6 = arith.addf %0, %5 : vector<16x128xf32>
    %c0_4 = arith.constant 0 : index
    %c0_5 = arith.constant 0 : index
    %c8 = arith.constant 8 : index
    %7 = vector.load %arg1[%c0_4, %c0_5, %c8] : memref<1x18x144xf32, #tpu.memory_space<vmem>>, vector<1x16x128xf32>
    %8 = vector.shape_cast %7 : vector<1x16x128xf32> to vector<16x128xf32>
    %c1 = arith.constant 1 : index
    %c0_6 = arith.constant 0 : index
    %9 = vector.load %arg2[%c1, %c0_6] : memref<9x128xf32, #tpu.memory_space<vmem>>, vector<1x128xf32>
    %10 = vector.broadcast %9 : vector<1x128xf32> to vector<16x128xf32>
    %11 = arith.mulf %10, %8 : vector<16x128xf32>
    %12 = arith.addf %6, %11 : vector<16x128xf32>
    %c0_7 = arith.constant 0 : index
    %c0_8 = arith.constant 0 : index
    %c16 = arith.constant 16 : index
    %13 = vector.load %arg1[%c0_7, %c0_8, %c16] : memref<1x18x144xf32, #tpu.memory_space<vmem>>, vector<1x16x128xf32>
    %14 = vector.shape_cast %13 : vector<1x16x128xf32> to vector<16x128xf32>
    %c2 = arith.constant 2 : index
    %c0_9 = arith.constant 0 : index
    %15 = vector.load %arg2[%c2, %c0_9] : memref<9x128xf32, #tpu.memory_space<vmem>>, vector<1x128xf32>
    %16 = vector.broadcast %15 : vector<1x128xf32> to vector<16x128xf32>
    %17 = arith.mulf %16, %14 : vector<16x128xf32>
    %18 = arith.addf %12, %17 : vector<16x128xf32>
    %c0_10 = arith.constant 0 : index
    %c1_11 = arith.constant 1 : index
    %c0_12 = arith.constant 0 : index
    %19 = vector.load %arg1[%c0_10, %c1_11, %c0_12] : memref<1x18x144xf32, #tpu.memory_space<vmem>>, vector<1x16x128xf32>
    %20 = vector.shape_cast %19 : vector<1x16x128xf32> to vector<16x128xf32>
    %c3 = arith.constant 3 : index
    %c0_13 = arith.constant 0 : index
    %21 = vector.load %arg2[%c3, %c0_13] : memref<9x128xf32, #tpu.memory_space<vmem>>, vector<1x128xf32>
    %22 = vector.broadcast %21 : vector<1x128xf32> to vector<16x128xf32>
    %23 = arith.mulf %22, %20 : vector<16x128xf32>
    %24 = arith.addf %18, %23 : vector<16x128xf32>
    %c0_14 = arith.constant 0 : index
    %c1_15 = arith.constant 1 : index
    %c8_16 = arith.constant 8 : index
    %25 = vector.load %arg1[%c0_14, %c1_15, %c8_16] : memref<1x18x144xf32, #tpu.memory_space<vmem>>, vector<1x16x128xf32>
    %26 = vector.shape_cast %25 : vector<1x16x128xf32> to vector<16x128xf32>
    %c4 = arith.constant 4 : index
    %c0_17 = arith.constant 0 : index
    %27 = vector.load %arg2[%c4, %c0_17] : memref<9x128xf32, #tpu.memory_space<vmem>>, vector<1x128xf32>
    %28 = vector.broadcast %27 : vector<1x128xf32> to vector<16x128xf32>
    %29 = arith.mulf %28, %26 : vector<16x128xf32>
    %30 = arith.addf %24, %29 : vector<16x128xf32>
    %c0_18 = arith.constant 0 : index
    %c1_19 = arith.constant 1 : index
    %c16_20 = arith.constant 16 : index
    %31 = vector.load %arg1[%c0_18, %c1_19, %c16_20] : memref<1x18x144xf32, #tpu.memory_space<vmem>>, vector<1x16x128xf32>
    %32 = vector.shape_cast %31 : vector<1x16x128xf32> to vector<16x128xf32>
    %c5 = arith.constant 5 : index
    %c0_21 = arith.constant 0 : index
    %33 = vector.load %arg2[%c5, %c0_21] : memref<9x128xf32, #tpu.memory_space<vmem>>, vector<1x128xf32>
    %34 = vector.broadcast %33 : vector<1x128xf32> to vector<16x128xf32>
    %35 = arith.mulf %34, %32 : vector<16x128xf32>
    %36 = arith.addf %30, %35 : vector<16x128xf32>
    %c0_22 = arith.constant 0 : index
    %c2_23 = arith.constant 2 : index
    %c0_24 = arith.constant 0 : index
    %37 = vector.load %arg1[%c0_22, %c2_23, %c0_24] : memref<1x18x144xf32, #tpu.memory_space<vmem>>, vector<1x16x128xf32>
    %38 = vector.shape_cast %37 : vector<1x16x128xf32> to vector<16x128xf32>
    %c6 = arith.constant 6 : index
    %c0_25 = arith.constant 0 : index
    %39 = vector.load %arg2[%c6, %c0_25] : memref<9x128xf32, #tpu.memory_space<vmem>>, vector<1x128xf32>
    %40 = vector.broadcast %39 : vector<1x128xf32> to vector<16x128xf32>
    %41 = arith.mulf %40, %38 : vector<16x128xf32>
    %42 = arith.addf %36, %41 : vector<16x128xf32>
    %c0_26 = arith.constant 0 : index
    %c2_27 = arith.constant 2 : index
    %c8_28 = arith.constant 8 : index
    %43 = vector.load %arg1[%c0_26, %c2_27, %c8_28] : memref<1x18x144xf32, #tpu.memory_space<vmem>>, vector<1x16x128xf32>
    %44 = vector.shape_cast %43 : vector<1x16x128xf32> to vector<16x128xf32>
    %c7 = arith.constant 7 : index
    %c0_29 = arith.constant 0 : index
    %45 = vector.load %arg2[%c7, %c0_29] : memref<9x128xf32, #tpu.memory_space<vmem>>, vector<1x128xf32>
    %46 = vector.broadcast %45 : vector<1x128xf32> to vector<16x128xf32>
    %47 = arith.mulf %46, %44 : vector<16x128xf32>
    %48 = arith.addf %42, %47 : vector<16x128xf32>
    %c0_30 = arith.constant 0 : index
    %c2_31 = arith.constant 2 : index
    %c16_32 = arith.constant 16 : index
    %49 = vector.load %arg1[%c0_30, %c2_31, %c16_32] : memref<1x18x144xf32, #tpu.memory_space<vmem>>, vector<1x16x128xf32>
    %50 = vector.shape_cast %49 : vector<1x16x128xf32> to vector<16x128xf32>
    %c8_33 = arith.constant 8 : index
    %c0_34 = arith.constant 0 : index
    %51 = vector.load %arg2[%c8_33, %c0_34] : memref<9x128xf32, #tpu.memory_space<vmem>>, vector<1x128xf32>
    %52 = vector.broadcast %51 : vector<1x128xf32> to vector<16x128xf32>
    %53 = arith.mulf %52, %50 : vector<16x128xf32>
    %54 = arith.addf %48, %53 : vector<16x128xf32>
    %c0_35 = arith.constant 0 : index
    %c0_36 = arith.constant 0 : index
    %55 = vector.load %arg3[%c0_35, %c0_36] : memref<1x128xf32, #tpu.memory_space<vmem>>, vector<1x128xf32>
    %56 = vector.broadcast %55 : vector<1x128xf32> to vector<16x128xf32>
    %57 = arith.addf %54, %56 : vector<16x128xf32>
    %c0_37 = arith.constant 0 : index
    %c0_38 = arith.constant 0 : index
    %c0_39 = arith.constant 0 : index
    %58 = vector.load %arg4[%c0_37, %c0_38, %c0_39] : memref<1x16x128xf32, #tpu.memory_space<vmem>>, vector<1x16x128xf32>
    %59 = vector.shape_cast %58 : vector<1x16x128xf32> to vector<16x128xf32>
    %60 = vector.shape_cast %57 : vector<16x128xf32> to vector<1x16x128xf32>
    tpu.vector_store %arg4[%c0_37, %c0_38, %c0_39], %60 {strides = array<i32>} : memref<1x16x128xf32, #tpu.memory_space<vmem>>, vector<1x16x128xf32>,
    return
  }
  func.func @transform_0(%arg0: i32) -> (i32, i32, i32) {
    %c0_i32 = arith.constant 0 : i32
    %c0_i32_0 = arith.constant 0 : i32
    %c0_i32_1 = arith.constant 0 : i32
    return %arg0, %c0_i32, %c0_i32_0 : i32, i32, i32
  }
  func.func @transform_1(%arg0: i32) -> (i32, i32) {
    %c0_i32 = arith.constant 0 : i32
    %c0_i32_0 = arith.constant 0 : i32
    %c0_i32_1 = arith.constant 0 : i32
    return %c0_i32, %c0_i32_0 : i32, i32
  }
  func.func @transform_2(%arg0: i32) -> (i32, i32) {
    %c0_i32 = arith.constant 0 : i32
    %c0_i32_0 = arith.constant 0 : i32
    %c0_i32_1 = arith.constant 0 : i32
    return %c0_i32, %c0_i32_0 : i32, i32
  }
  func.func @transform_3(%arg0: i32) -> (i32, i32, i32) {
    %c0_i32 = arith.constant 0 : i32
    %c0_i32_0 = arith.constant 0 : i32
    %c0_i32_1 = arith.constant 0 : i32
    return %arg0, %c0_i32, %c0_i32_0 : i32, i32, i32
  }
}

</mosaic_0001>

<llo_original>
// kernel: tpu_custom_call.1
$region0: #{tpu_custom_call.1}
  #allocation0 [shape = 'u32[]', space=smem, size = 0x4, offset = 0x4, fixed_abs, tag = 'smem constant byte address 0x4 - core index']
  #allocation1 [shape = 'u32[144,128]{1,0:T(1,128)}', space=vmem, size = 0x12000, scoped, tag = 'internal scratch']
  %s0 = inlined_call_operand.vmem [shape: f32[2,18,144], index: 0, kind: input, shape index: {}]
  %s1 = inlined_call_operand.vmem [shape: f32[9,128], index: 1, kind: input, shape index: {}]
  %s2 = inlined_call_operand.vmem [shape: f32[1,128], index: 2, kind: input, shape index: {}]
  %s3 = inlined_call_operand.hbm [shape: f32[2,16,128], index: 3, kind: output, shape index: {}]
  %s4 = sld [smem:[#allocation0]]
  $region45: #{tpu_custom_call.1} parent=0
    _
  %s6 = ssub.s32 1, %s4
  %s7 = scalar_select 0, %s6, %s4
  $region1: #{tpu_custom_call.1} parent=0
    #allocation2 [shape = 'u8[16384]{0}', space=vmem, size = 0x4000, scoped, tag = 'output window, operand 0']
    #allocation3 [shape = 's32[2]{0}', space=sflag, size = 0x8, scoped, tag = 'scoped memory for tpu_custom_call.1']
    %8 = vsyncpa [#allocation3], 0
    %s9 = scalar_lea.sflag [#allocation3], 1
    %10 = vsyncpa %s9, 0
    loop: start=0, step=1, limit=4
    $region2: #{tpu_custom_call.1} parent=1 // loop_pre_header
      _
    $region3: #{tpu_custom_call.1} parent=1 // loop_header
      %s12 = sphi 0, %s16
      %p13 = scmp.ge.s32.totalorder %s12, 4
      %s22 = sphi 0, %s24
      %s25 = sphi 0, %s22
      %s26 = sphi 0, %s25
      %s42 = sphi 0, %s26
      %s46 = sphi 0, %s46
      %s48 = sphi 0, %s46
      %s49 = sphi 0, %s48
      %s63 = sphi 0, %s49
      %s67 = sphi 0, %s67
      %s69 = sphi 0, %s67
      %s70 = sphi 0, %s69
      %s84 = sphi 0, %s70
      %s90 = sphi 0, %s92
      %s93 = sphi 0, %s90
      %s94 = sphi 0, %s93
      %s110 = sphi 0, %s94
    $region4: #{tpu_custom_call.1} parent=1 // loop_header_branch
      %15 = sbr.rel (%p13) target = $region8
    $region5: #{tpu_custom_call.1} parent=1 // loop_body
      %s17 = ssub.s32 %s12, 1
      %s18 = ssub.s32 %s12, 2
      %s19 = sadd.s32 %s12, 1
      %s20 = ssub.s32 %s12, %s19
      %p21 = scmp.eq.s32.totalorder %s20, 0
      %s23 = sadd.s32 %s22, 1
      %s24 = scalar_select %p21, %s22, %s23
      %p27 = pneg %p21
      %p28 = scmp.eq.s32.totalorder %s12, 1
      %p29 = por %p27, %p28
      %p30 = scmp.ne.s32.totalorder %s22, %s25
      %p31 = scmp.eq.s32.totalorder %s12, 0
      %p32 = por %p30, %p31
      %p33 = scmp.ne.s32.totalorder %s22, %s25
      %p34 = scmp.eq.s32.totalorder %s17, 1
      %p35 = por %p33, %p34
      %p36 = scmp.ne.s32.totalorder %s25, %s26
      %p37 = scmp.eq.s32.totalorder %s17, 0
      %p38 = por %p36, %p37
      %p39 = scmp.ne.s32.totalorder %s25, %s26
      %p40 = scmp.eq.s32.totalorder %s18, 1
      %p41 = por %p39, %p40
      %p43 = scmp.ne.s32.totalorder %s26, %s42
      %p44 = scmp.eq.s32.totalorder %s18, 0
      %p45 = por %p43, %p44
      %s47 = sadd.s32 %s46, 1
      %p50 = scmp.eq.s32.totalorder %s12, 1
      %p51 = scmp.ne.s32.totalorder %s46, %s48
      %p52 = scmp.eq.s32.totalorder %s12, 0
      %p53 = por %p51, %p52
      %p54 = scmp.ne.s32.totalorder %s46, %s48
      %p55 = scmp.eq.s32.totalorder %s17, 1
      %p56 = por %p54, %p55
      %p57 = scmp.ne.s32.totalorder %s48, %s49
      %p58 = scmp.eq.s32.totalorder %s17, 0
      %p59 = por %p57, %p58
      %p60 = scmp.ne.s32.totalorder %s48, %s49
      %p61 = scmp.eq.s32.totalorder %s18, 1
      %p62 = por %p60, %p61
      %p64 = scmp.ne.s32.totalorder %s49, %s63
      %p65 = scmp.eq.s32.totalorder %s18, 0
      %p66 = por %p64, %p65
      %s68 = sadd.s32 %s67, 1
      %p71 = scmp.eq.s32.totalorder %s12, 1
      %p72 = scmp.ne.s32.totalorder %s67, %s69
      %p73 = scmp.eq.s32.totalorder %s12, 0
      %p74 = por %p72, %p73
      %p75 = scmp.ne.s32.totalorder %s67, %s69
      %p76 = scmp.eq.s32.totalorder %s17, 1
      %p77 = por %p75, %p76
      %p78 = scmp.ne.s32.totalorder %s69, %s70
      %p79 = scmp.eq.s32.totalorder %s17, 0
      %p80 = por %p78, %p79
      %p81 = scmp.ne.s32.totalorder %s69, %s70
      %p82 = scmp.eq.s32.totalorder %s18, 1
      %p83 = por %p81, %p82
      %p85 = scmp.ne.s32.totalorder %s70, %s84
      %p86 = scmp.eq.s32.totalorder %s18, 0
      %p87 = por %p85, %p86
      %s88 = ssub.s32 %s12, %s19
      %p89 = scmp.eq.s32.totalorder %s88, 0
      %s91 = sadd.s32 %s90, 1
      %s92 = scalar_select %p89, %s90, %s91
      %p95 = pneg %p89
      %p96 = scmp.eq.s32.totalorder %s12, 1
      %p97 = por %p95, %p96
      %p98 = scmp.ne.s32.totalorder %s90, %s93
      %p99 = scmp.eq.s32.totalorder %s12, 0
      %p100 = por %p98, %p99
      %p101 = scmp.ne.s32.totalorder %s90, %s93
      %p102 = scmp.eq.s32.totalorder %s17, 1
      %p103 = por %p101, %p102
      %p104 = scmp.ne.s32.totalorder %s93, %s94
      %p105 = scmp.eq.s32.totalorder %s17, 0
      %p106 = por %p104, %p105
      %p107 = scmp.ne.s32.totalorder %s93, %s94
      %p108 = scmp.eq.s32.totalorder %s18, 1
      %p109 = por %p107, %p108
      %p111 = scmp.ne.s32.totalorder %s94, %s110
      %p112 = scmp.eq.s32.totalorder %s18, 0
      %p113 = por %p111, %p112
      %p114 = scmp.le.s32.totalorder 1, %s12
      %p115 = scmp.lt.s32.totalorder %s12, 3
      %p116 = pnand %p114, %p115
      %p117 = pneg %p116
      // Predicated region
      $region9: #{tpu_custom_call.1} parent=5 // pred_check
        _
      $region10: #{tpu_custom_call.1} parent=5 // pred_check_branch
        %119 = sbr.rel (%p116) target = $region12
      $region11: #{tpu_custom_call.1} parent=5 // pred_region
        %s120 = ssub.s32 %s12, 1
        // Predicated region
        $region13: #{tpu_custom_call.1} parent=11 // pred_check
          %p121 = pneg %p59
        $region14: #{tpu_custom_call.1} parent=11 // pred_check_branch
          %123 = sbr.rel (%p121) target = $region16
        $region15: #{tpu_custom_call.1} parent=11 // pred_region
          _
        $region16: #{tpu_custom_call.1} parent=11 // pred_fallthru
          _
        // Predicated region
        $region17: #{tpu_custom_call.1} parent=11 // pred_check
          %p124 = pneg %p80
        $region18: #{tpu_custom_call.1} parent=11 // pred_check_branch
          %126 = sbr.rel (%p124) target = $region20
        $region19: #{tpu_custom_call.1} parent=11 // pred_region
          _
        $region20: #{tpu_custom_call.1} parent=11 // pred_fallthru
          _
      $region12: #{tpu_custom_call.1} parent=5 // pred_fallthru
        _
      %p127 = scmp.lt.s32.totalorder %s12, 2
      // Predicated region
      $region21: #{tpu_custom_call.1} parent=5 // pred_check
        %p128 = pneg %p127
      $region22: #{tpu_custom_call.1} parent=5 // pred_check_branch
        %130 = sbr.rel (%p128) target = $region24
      $region23: #{tpu_custom_call.1} parent=5 // pred_region
        // Predicated region
        $region25: #{tpu_custom_call.1} parent=23 // pred_check
          %p131 = pneg %p32
        $region26: #{tpu_custom_call.1} parent=23 // pred_check_branch
          %133 = sbr.rel (%p131) target = $region28
        $region27: #{tpu_custom_call.1} parent=23 // pred_region
          %p134 = scmp.lt.s32.totalorder %s12, 1
          %s135 = scalar_select %p134, %s12, 1
          %s136 = smul.addr %s135, 6
          %s137 = smul.addr %s136, 8
          %s138 = scalar_lea.vmem %s0, %s137
        $region28: #{tpu_custom_call.1} parent=23 // pred_fallthru
          _
      $region24: #{tpu_custom_call.1} parent=5 // pred_fallthru
        _
      %p139 = scmp.le.s32.totalorder 1, %s12
      %p140 = scmp.lt.s32.totalorder %s12, 3
      %p141 = pnand %p139, %p140
      %p142 = pneg %p141
      // Predicated region
      $region29: #{tpu_custom_call.1} parent=5 // pred_check
        _
      $region30: #{tpu_custom_call.1} parent=5 // pred_check_branch
        %144 = sbr.rel (%p141) target = $region32
      $region31: #{tpu_custom_call.1} parent=5 // pred_region
        %s145 = ssub.s32 %s12, 1
        %p146 = scmp.lt.s32.totalorder %s17, 1
        %s147 = scalar_select %p146, %s17, 1
        %s148 = smul.addr %s147, 6
        %s149 = smul.addr %s148, 8
        %s150 = scalar_lea.vmem %s0, %s149
        %p151 = pneg %p38
        %p152 = pneg %p35
        %p153 = pneg %p59
        %p154 = pneg %p56
        %p155 = pneg %p80
        %p156 = pneg %p77
        %p157 = pneg %p106
        %p158 = pneg %p103
        %s159 = sand.u32 %s93, 1
        %s160 = scalar_lea.sflag [#allocation3], %s159
        %s161 = sand.u32 %s93, 1
        %s162 = smul.addr %s161, 16
        %s163 = scalar_lea.vmem [#allocation2], %s162
        %p164 = scmp.lt.s32.totalorder %s17, 1
        %s165 = scalar_select %p164, %s17, 1
        %s166 = smul.addr %s165, 6
        %s167 = smul.addr %s166, 8
        %s168 = scalar_lea.vmem %s0, %s167
        %v169 = vld [vmem:[%s168] sm:$0xff]
        %v170 = vld [vmem:[%s168 + $0x10] sm:$0xff]
        %v171 = vld [vmem:[%s1] sm:$0x1]
        %v172 = vlaneseq
        %v173 = vshrl.u32 %v172, 7
        %v174 = vsub.s32 0, %v173
        %v175 = vrot.slane %v171, %v174
        %v176 = vmul.f32 %v175, %v169
        %v177 = vmul.f32 %v175, %v170
        %v178 = vadd.f32 %v176, 0.0
        %v179 = vadd.f32 %v177, 0.0
        %v180 = vld [vmem:[%s168 + $0x8] sm:$0xff]
        %v181 = vld [vmem:[%s168 + $0x18] sm:$0xff]
        %v182 = vld [vmem:[%s1 + $0x1] sm:$0x1]
        %v183 = vlaneseq
        %v184 = vshrl.u32 %v183, 7
        %v185 = vsub.s32 0, %v184
        %v186 = vrot.slane %v182, %v185
        %191 = vrot.lane.b32.xlu0 %v169, 120
        %v192 = vpop.permute.xlu0 %191
        %193 = vrot.lane.b32.xlu0 %v180, 120
        %v194 = vpop.permute.xlu0 %193
        %195 = vrot.lane.b32.xlu0 %v170, 120
        %v196 = vpop.permute.xlu0 %195
        %197 = vrot.lane.b32.xlu0 %v181, 120
        %v198 = vpop.permute.xlu0 %197
        %vm199 = vcmask 982016
        %v200 = vsel %vm199, %v192, %v194
        %v201 = vsel %vm199, %v196, %v198
        %v204 = vmul.f32 %v186, %v200
        %v205 = vmul.f32 %v186, %v201
        %v206 = vadd.f32 %v178, %v204
        %v207 = vadd.f32 %v179, %v205
        %v208 = vld [vmem:[%s1 + $0x2] sm:$0x1]
        %v209 = vlaneseq
        %v210 = vshrl.u32 %v209, 7
        %v211 = vsub.s32 0, %v210
        %v212 = vrot.slane %v208, %v211
        %213 = vrot.lane.b32.xlu0 %v169, 112
        %v214 = vpop.permute.xlu0 %213
        %215 = vrot.lane.b32.xlu0 %v180, 112
        %v216 = vpop.permute.xlu0 %215
        %217 = vrot.lane.b32.xlu0 %v170, 112
        %v218 = vpop.permute.xlu0 %217
        %219 = vrot.lane.b32.xlu0 %v181, 112
        %v220 = vpop.permute.xlu0 %219
        %vm221 = vcmask 916480
        %v222 = vsel %vm221, %v214, %v216
        %v223 = vsel %vm221, %v218, %v220
        %v226 = vmul.f32 %v212, %v222
        %v227 = vmul.f32 %v212, %v223
        %v228 = vadd.f32 %v206, %v226
        %v229 = vadd.f32 %v207, %v227
        %v230 = vld [vmem:[%s168] sm:$0xfe]
        %v231 = vld [vmem:[%s168 + $0x20] sm:$0x1]
        %v232 = vld [vmem:[%s1 + $0x3] sm:$0x1]
        %v233 = vlaneseq
        %v234 = vshrl.u32 %v233, 7
        %v235 = vsub.s32 0, %v234
        %v236 = vrot.slane %v232, %v235
        %v237 = vmul.f32 %v236, %v230
        %v238 = vmul.f32 %v236, %v170
        %v239 = vmul.f32 %v236, %v231
        %vm243 = vcmask 1046528
        %v244 = vrot.slane %v237, 1
        %v245 = vrot.slane %v238, 1
        %v246 = vsel %vm243, %v244, %v245
        %v247 = vrot.slane %v239, 1
        %v248 = vsel %vm243, %v245, %v247
        %v251 = vadd.f32 %v228, %v246
        %v252 = vadd.f32 %v229, %v248
        %v253 = vld [vmem:[%s168 + $0x8] sm:$0xfe]
        %v254 = vld [vmem:[%s168 + $0x28] sm:$0x1]
        %v255 = vld [vmem:[%s1 + $0x4] sm:$0x1]
        %v256 = vlaneseq
        %v257 = vshrl.u32 %v256, 7
        %v258 = vsub.s32 0, %v257
        %v259 = vrot.slane %v255, %v258
        %v264 = vrot.slane %v230, 1
        %v265 = vrot.slane %v170, 1
        %v266 = vsel %vm243, %v264, %v265
        %v267 = vrot.slane %v253, 1
        %v268 = vrot.slane %v181, 1
        %v269 = vsel %vm243, %v267, %v268
        %v270 = vrot.slane %v231, 1
        %v271 = vsel %vm243, %v265, %v270
        %v272 = vrot.slane %v254, 1
        %v273 = vsel %vm243, %v268, %v272
        %274 = vrot.lane.b32.xlu0 %v266, 120
        %v275 = vpop.permute.xlu0 %274
        %276 = vrot.lane.b32.xlu0 %v269, 120
        %v277 = vpop.permute.xlu0 %276
        %278 = vrot.lane.b32.xlu0 %v271, 120
        %v279 = vpop.permute.xlu0 %278
        %280 = vrot.lane.b32.xlu0 %v273, 120
        %v281 = vpop.permute.xlu0 %280
        %v282 = vsel %vm199, %v275, %v277
        %v283 = vsel %vm199, %v279, %v281
        %v286 = vmul.f32 %v259, %v282
        %v287 = vmul.f32 %v259, %v283
        %v288 = vadd.f32 %v251, %v286
        %v289 = vadd.f32 %v252, %v287
        %v290 = vld [vmem:[%s1 + $0x5] sm:$0x1]
        %v291 = vlaneseq
        %v292 = vshrl.u32 %v291, 7
        %v293 = vsub.s32 0, %v292
        %v294 = vrot.slane %v290, %v293
        %295 = vrot.lane.b32.xlu0 %v266, 112
        %v296 = vpop.permute.xlu0 %295
        %297 = vrot.lane.b32.xlu0 %v269, 112
        %v298 = vpop.permute.xlu0 %297
        %299 = vrot.lane.b32.xlu0 %v271, 112
        %v300 = vpop.permute.xlu0 %299
        %301 = vrot.lane.b32.xlu0 %v273, 112
        %v302 = vpop.permute.xlu0 %301
        %v303 = vsel %vm221, %v296, %v298
        %v304 = vsel %vm221, %v300, %v302
        %v307 = vmul.f32 %v294, %v303
        %v308 = vmul.f32 %v294, %v304
        %v309 = vadd.f32 %v288, %v307
        %v310 = vadd.f32 %v289, %v308
        %v311 = vld [vmem:[%s168] sm:$0xfc]
        %v312 = vld [vmem:[%s168 + $0x20] sm:$0x3]
        %v313 = vld [vmem:[%s1 + $0x6] sm:$0x1]
        %v314 = vlaneseq
        %v315 = vshrl.u32 %v314, 7
        %v316 = vsub.s32 0, %v315
        %v317 = vrot.slane %v313, %v316
        %v318 = vmul.f32 %v317, %v311
        %v319 = vmul.f32 %v317, %v170
        %v320 = vmul.f32 %v317, %v312
        %vm324 = vcmask 1045504
        %v325 = vrot.slane %v318, 2
        %v326 = vrot.slane %v319, 2
        %v327 = vsel %vm324, %v325, %v326
        %v328 = vrot.slane %v320, 2
        %v329 = vsel %vm324, %v326, %v328
        %v332 = vadd.f32 %v309, %v327
        %v333 = vadd.f32 %v310, %v329
        %v334 = vld [vmem:[%s168 + $0x8] sm:$0xfc]
        %v335 = vld [vmem:[%s168 + $0x28] sm:$0x3]
        %v336 = vld [vmem:[%s1 + $0x7] sm:$0x1]
        %v337 = vlaneseq
        %v338 = vshrl.u32 %v337, 7
        %v339 = vsub.s32 0, %v338
        %v340 = vrot.slane %v336, %v339
        %v345 = vrot.slane %v311, 2
        %v346 = vrot.slane %v170, 2
        %v347 = vsel %vm324, %v345, %v346
        %v348 = vrot.slane %v334, 2
        %v349 = vrot.slane %v181, 2
        %v350 = vsel %vm324, %v348, %v349
        %v351 = vrot.slane %v312, 2
        %v352 = vsel %vm324, %v346, %v351
        %v353 = vrot.slane %v335, 2
        %v354 = vsel %vm324, %v349, %v353
        %355 = vrot.lane.b32.xlu0 %v347, 120
        %v356 = vpop.permute.xlu0 %355
        %357 = vrot.lane.b32.xlu0 %v350, 120
        %v358 = vpop.permute.xlu0 %357
        %359 = vrot.lane.b32.xlu0 %v352, 120
        %v360 = vpop.permute.xlu0 %359
        %361 = vrot.lane.b32.xlu0 %v354, 120
        %v362 = vpop.permute.xlu0 %361
        %v363 = vsel %vm199, %v356, %v358
        %v364 = vsel %vm199, %v360, %v362
        %v367 = vmul.f32 %v340, %v363
        %v368 = vmul.f32 %v340, %v364
        %v369 = vadd.f32 %v332, %v367
        %v370 = vadd.f32 %v333, %v368
        %v371 = vld [vmem:[%s1 + $0x8] sm:$0x1]
        %v372 = vlaneseq
        %v373 = vshrl.u32 %v372, 7
        %v374 = vsub.s32 0, %v373
        %v375 = vrot.slane %v371, %v374
        %376 = vrot.lane.b32.xlu0 %v347, 112
        %v377 = vpop.permute.xlu0 %376
        %378 = vrot.lane.b32.xlu0 %v350, 112
        %v379 = vpop.permute.xlu0 %378
        %380 = vrot.lane.b32.xlu0 %v352, 112
        %v381 = vpop.permute.xlu0 %380
        %382 = vrot.lane.b32.xlu0 %v354, 112
        %v383 = vpop.permute.xlu0 %382
        %v384 = vsel %vm221, %v377, %v379
        %v385 = vsel %vm221, %v381, %v383
        %v388 = vmul.f32 %v375, %v384
        %v389 = vmul.f32 %v375, %v385
        %v390 = vadd.f32 %v369, %v388
        %v391 = vadd.f32 %v370, %v389
        %v392 = vld [vmem:[%s2] sm:$0x1]
        %v394 = vlaneseq
        %v395 = vshrl.u32 %v394, 7
        %v396 = vsub.s32 0, %v395
        %v397 = vrot.slane %v392, %v396
        %v399 = vadd.f32 %v390, %v397
        %v400 = vadd.f32 %v391, %v397
        %401 = vst [vmem:[%s163] sm:$0xff] %v399
        %402 = vst [vmem:[%s163 + $0x8] sm:$0xff] %v400
        %s403 = sand.u32 %s93, 1
        %s404 = scalar_lea.sflag [#allocation3], %s403
        %s405 = sand.u32 %s93, 1
        %s406 = smul.addr %s405, 16
        %s407 = scalar_lea.vmem [#allocation2], %s406
        // Predicated region
        $region33: #{tpu_custom_call.1} parent=31 // pred_check
          %p408 = pneg %p103
        $region34: #{tpu_custom_call.1} parent=31 // pred_check_branch
          %410 = sbr.rel (%p408) target = $region36
        $region35: #{tpu_custom_call.1} parent=31 // pred_region
          %s412 = ssub.s32 256, 256
          %413 = vsyncadd %s404, %s412
          %s414 = smul.addr %s17, 2
          %s415 = smul.addr %s414, 128
          %s416 = scalar_lea.hbm %s3, %s415
          %s417 = sshll.u32 %s407, 4
          %s418 = int_to_ptr.vmem [resolvable:$true] %s417
          %423 = dma.vmem_to_hbm [thread:$0]  %s418, 256, %s416, %s404, 128, 128, 8
        $region36: #{tpu_custom_call.1} parent=31 // pred_fallthru
          _
      $region32: #{tpu_custom_call.1} parent=5 // pred_fallthru
        _
      %p424 = scmp.le.s32.totalorder 2, %s12
      // Predicated region
      $region37: #{tpu_custom_call.1} parent=5 // pred_check
        %p425 = pneg %p424
      $region38: #{tpu_custom_call.1} parent=5 // pred_check_branch
        %427 = sbr.rel (%p425) target = $region40
      $region39: #{tpu_custom_call.1} parent=5 // pred_region
        %s428 = ssub.s32 %s12, 2
        // Predicated region
        $region41: #{tpu_custom_call.1} parent=39 // pred_check
          %p429 = pneg %p109
        $region42: #{tpu_custom_call.1} parent=39 // pred_check_branch
          %431 = sbr.rel (%p429) target = $region44
        $region43: #{tpu_custom_call.1} parent=39 // pred_region
          %s432 = sand.u32 %s94, 1
          %s433 = scalar_lea.sflag [#allocation3], %s432
          %s434 = sand.u32 %s94, 1
          %s435 = smul.addr %s434, 16
          %s436 = scalar_lea.vmem [#allocation2], %s435
          %437 = dma.done %s433, 256
        $region44: #{tpu_custom_call.1} parent=39 // pred_fallthru
          _
      $region40: #{tpu_custom_call.1} parent=5 // pred_fallthru
        _
    $region6: #{tpu_custom_call.1} parent=1 // loop_footer
      %s16 = sadd.s32 1, %s12
    $region7: #{tpu_custom_call.1} parent=1 // loop_footer_branch
      %11 = sbr.rel target = $region3
    $region8: #{tpu_custom_call.1} parent=1 // loop_exit
      _
    %438 = vsyncpa [#allocation3], 1
    %s439 = scalar_lea.sflag [#allocation3], 1
    %440 = vsyncpa %s439, 1

</llo_original>
